<compile_context>
chip_gen: v5e
topology: v5e:2x2
jax: 0.10.0
libtpu: 0.0.40
codegen_flags: <defaults>
</compile_context>

<pallas_src>
import functools

import jax
import jax.numpy as jnp
from jax.experimental import pallas as pl
from jax.experimental.pallas import tpu as pltpu

BN_EPS = 1e-5
LANE = 128


def _pad_to(d, m=LANE):
    return ((d + m - 1) // m) * m


def _encoder_kernel(num_layers, x_ref, w_ref, vec_ref, out_ref):
    # x_ref:   (B, P)            activations, batch on sublanes, features on lanes
    # w_ref:   (L+1, P, P)       layer 0..L-1 weights, then fused mu|log_var head
    # vec_ref: (2L+1, P)         [gamma_0, beta_0, ..., gamma_{L-1}, beta_{L-1}, b_head]
    # out_ref: (B, P)            fused mu|log_var output (lane-dense store)
    vecs = vec_ref[...]  # tiny (2L+1, P) tile; load once, slice as values
    h = x_ref[...]
    for l in range(num_layers):
        w = w_ref[l]                       # (P, P), static leading-axis index
        gamma = vecs[2 * l:2 * l + 1, :]   # (1, P)
        beta = vecs[2 * l + 1:2 * l + 2, :]
        # Linear (MXU). Hidden-layer bias folded away: training-mode BatchNorm
        # subtracts the batch mean immediately, so the bias cancels exactly.
        y = jnp.dot(h, w, preferred_element_type=jnp.float32)
        # BatchNorm1d (training mode, biased batch variance) as one scale/shift.
        mean = jnp.mean(y, axis=0, keepdims=True)
        mean_sq = jnp.mean(y * y, axis=0, keepdims=True)
        var = jnp.maximum(mean_sq - mean * mean, 0.0)  # clamp: no rsqrt(<0) NaN
        scale = gamma * jax.lax.rsqrt(var + BN_EPS)
        shift = beta - mean * scale
        # Affine + ReLU in one fused elementwise pass.
        h = jnp.maximum(y * scale + shift, 0.0)

    # Fused mu/log_var heads: single matmul, single lane-dense store.
    b_head = vecs[2 * num_layers:2 * num_layers + 1, :]
    out_ref[...] = (
        jnp.dot(h, w_ref[num_layers], preferred_element_type=jnp.float32)
        + b_head
    )


def encoder_forward(x, layer_params, mu_params, lv_params):
    """x: (B, input_dim).
    layer_params: list of (W(in,out), b(1,out), gamma(1,out), beta(1,out)).
    mu_params / lv_params: (W(hidden, z_dim), b(1, z_dim))."""
    num_layers = len(layer_params)
    B, input_dim = x.shape
    z_dim = mu_params[0].shape[1]
    head_dim = 2 * z_dim
    f32 = jnp.float32

    # ---- host-side prep ------------------------------------------------------
    # One uniform padded width P (max over all padded feature dims) so every
    # layer weight fits the same (P, P) slot of a single stacked slab. Padded
    # lanes stay exactly zero through every layer because padded gamma/beta are
    # zero (scale = shift = 0 -> ReLU(0) = 0).
    dims = [input_dim] + [w.shape[1] for (w, _b, _g, _be) in layer_params] + [head_dim]
    P = max(_pad_to(d) for d in dims)

    x_p = jnp.zeros((B, P), f32).at[:, :input_dim].set(x.astype(f32))

    # Weight slab: (L+1, P, P). Hidden-layer biases are intentionally dropped:
    # valid ONLY because every hidden Linear is immediately followed by a
    # training-mode BatchNorm1d (which subtracts the batch mean). If the layer
    # stack changes or eval-mode (running stats) is needed, reinstate the bias.
    w_slabs = []
    prev_dim = input_dim
    for (w, _b, g, be) in layer_params:
        out_dim = w.shape[1]
        w_p = jnp.zeros((P, P), f32).at[:prev_dim, :out_dim].set(w.astype(f32))
        w_slabs.append(w_p)
        prev_dim = out_dim

    w_head = jnp.concatenate(
        [mu_params[0].astype(f32), lv_params[0].astype(f32)], axis=1)
    w_slabs.append(
        jnp.zeros((P, P), f32).at[:prev_dim, :head_dim].set(w_head))
    w_slab = jnp.stack(w_slabs, axis=0)  # (L+1, P, P)

    # Vector slab: (2L+1, P) = [gamma_l, beta_l]*L ++ [b_head]. One DMA, one tile.
    vec_rows = []
    for (w, _b, g, be) in layer_params:
        out_dim = w.shape[1]
        vec_rows.append(jnp.zeros((P,), f32).at[:out_dim].set(g.reshape(-1).astype(f32)))
        vec_rows.append(jnp.zeros((P,), f32).at[:out_dim].set(be.reshape(-1).astype(f32)))
    b_head = jnp.concatenate(
        [mu_params[1].astype(f32), lv_params[1].astype(f32)], axis=1).reshape(-1)
    vec_rows.append(jnp.zeros((P,), f32).at[:head_dim].set(b_head))
    vec_slab = jnp.stack(vec_rows, axis=0)  # (2L+1, P)

    # Tight VMEM request: resident footprint (double-buffered by Pallas) plus
    # margin for compiler scratch; floor of 2 MiB, never the whole chip.
    footprint_bytes = 4 * (x_p.size + w_slab.size + vec_slab.size + B * P)
    vmem_bytes = int(min(max(4 * footprint_bytes, 2 << 20), 32 << 20))

    vmem = pl.BlockSpec(memory_space=pltpu.MemorySpace.VMEM)
    kernel = functools.partial(_encoder_kernel, num_layers)
    out = pl.pallas_call(
        kernel,
        out_shape=jax.ShapeDtypeStruct((B, P), f32),
        in_specs=[vmem, vmem, vmem],
        out_specs=vmem,
        compiler_params=pltpu.CompilerParams(vmem_limit_bytes=vmem_bytes),
    )(x_p, w_slab, vec_slab)
    return out[:, :z_dim], out[:, z_dim:head_dim]


def _reference(x, layer_params, mu_params, lv_params):
    # Pure-JAX reference, kept in the original (bias-included, two-pass BN) form.
    h = x
    for (w, b, g, be) in layer_params:
        y = h @ w + b
        m = jnp.mean(y, axis=0, keepdims=True)
        v = jnp.mean((y - m) ** 2, axis=0, keepdims=True)
        y = (y - m) / jnp.sqrt(v + BN_EPS) * g + be
        h = jnp.maximum(y, 0.0)
    return h @ mu_params[0] + mu_params[1], h @ lv_params[0] + lv_params[1]


if __name__ == "__main__":
    B = 8
    input_dim = 32
    hidden_dims = (64, 32)
    z_dim = 16

    key = jax.random.PRNGKey(0)
    n_keys = 1 + 4 * len(hidden_dims) + 4
    keys = list(jax.random.split(key, n_keys))
    ki = iter(keys)

    x = jax.random.normal(next(ki), (B, input_dim), dtype=jnp.float32)

    layer_params = []
    in_dim = input_dim
    for h_dim in hidden_dims:
        w = 0.1 * jax.random.normal(next(ki), (in_dim, h_dim), dtype=jnp.float32)
        b = 0.1 * jax.random.normal(next(ki), (1, h_dim), dtype=jnp.float32)
        gamma = 1.0 + 0.1 * jax.random.normal(next(ki), (1, h_dim), dtype=jnp.float32)
        beta = 0.1 * jax.random.normal(next(ki), (1, h_dim), dtype=jnp.float32)
        layer_params.append((w, b, gamma, beta))
        in_dim = h_dim

    w_mu = 0.1 * jax.random.normal(next(ki), (hidden_dims[-1], z_dim), dtype=jnp.float32)
    b_mu = 0.1 * jax.random.normal(next(ki), (1, z_dim), dtype=jnp.float32)
    w_lv = 0.1 * jax.random.normal(next(ki), (hidden_dims[-1], z_dim), dtype=jnp.float32)
    b_lv = 0.1 * jax.random.normal(next(ki), (1, z_dim), dtype=jnp.float32)

    mu, log_var = encoder_forward(x, layer_params, (w_mu, b_mu), (w_lv, b_lv))
    jax.block_until_ready((mu, log_var))

    mu_ref, lv_ref = _reference(x, layer_params, (w_mu, b_mu), (w_lv, b_lv))
    assert mu.shape == (B, z_dim) and log_var.shape == (B, z_dim)
    assert jnp.allclose(mu, mu_ref, atol=1e-4, rtol=1e-4)
    assert jnp.allclose(log_var, lv_ref, atol=1e-4, rtol=1e-4)

    print("KERNEL_OK")
</pallas_src>

<mosaic_0001>
module attributes {stable_mosaic.version = 11 : i64} {
  func.func @_encoder_kernel(%arg0: memref<8x128xf32, #tpu.memory_space<vmem>>, %arg1: memref<3x128x128xf32, #tpu.memory_space<vmem>>, %arg2: memref<5x128xf32, #tpu.memory_space<vmem>>, %arg3: memref<8x128xf32, #tpu.memory_space<vmem>>) attributes {dimension_semantics = [], scalar_prefetch = 0 : i64, scratch_operands = 0 : i64, tpu.core_type = #tpu.core_type<tc>} {
    %c0 = arith.constant 0 : index
    %c0_0 = arith.constant 0 : index
    %0 = vector.load %arg2[%c0, %c0_0] : memref<5x128xf32, #tpu.memory_space<vmem>>, vector<5x128xf32>
    %c0_1 = arith.constant 0 : index
    %c0_2 = arith.constant 0 : index
    %1 = vector.load %arg0[%c0_1, %c0_2] : memref<8x128xf32, #tpu.memory_space<vmem>>, vector<8x128xf32>
    %c0_3 = arith.constant 0 : index
    %c0_4 = arith.constant 0 : index
    %c0_5 = arith.constant 0 : index
    %2 = vector.load %arg1[%c0_3, %c0_4, %c0_5] : memref<3x128x128xf32, #tpu.memory_space<vmem>>, vector<1x128x128xf32>
    %3 = vector.shape_cast %2 : vector<1x128x128xf32> to vector<128x128xf32>
    %4 = vector.extract_strided_slice %0 {offsets = [0, 0], sizes = [1, 128], strides = [1, 1]} : vector<5x128xf32> to vector<1x128xf32>
    %5 = vector.extract_strided_slice %0 {offsets = [1, 0], sizes = [1, 128], strides = [1, 1]} : vector<5x128xf32> to vector<1x128xf32>
    %cst = arith.constant dense<0.000000e+00> : vector<8x128xf32>
    %6 = tpu.matmul %1, %3, %cst {dimension_numbers = #tpu.dot_dimension_numbers<[1], [0], [0], [1], [0, 0, 1, 1], [], []>} : vector<8x128xf32>, vector<128x128xf32>, vector<8x128xf32> -> vector<8x128xf32>
    %cst_6 = arith.constant dense<0.000000e+00> : vector<128xf32>
    %7 = vector.multi_reduction <add>, %6, %cst_6 [0] : vector<8x128xf32> to vector<128xf32>
    %8 = vector.shape_cast %7 : vector<128xf32> to vector<1x128xf32>
    %cst_7 = arith.constant 8.000000e+00 : f32
    %9 = vector.broadcast %cst_7 : f32 to vector<1x128xf32>
    %10 = arith.divf %8, %9 : vector<1x128xf32>
    %11 = arith.mulf %6, %6 : vector<8x128xf32>
    %cst_8 = arith.constant dense<0.000000e+00> : vector<128xf32>
    %12 = vector.multi_reduction <add>, %11, %cst_8 [0] : vector<8x128xf32> to vector<128xf32>
    %13 = vector.shape_cast %12 : vector<128xf32> to vector<1x128xf32>
    %cst_9 = arith.constant 8.000000e+00 : f32
    %14 = vector.broadcast %cst_9 : f32 to vector<1x128xf32>
    %15 = arith.divf %13, %14 : vector<1x128xf32>
    %16 = arith.mulf %10, %10 : vector<1x128xf32>
    %17 = arith.subf %15, %16 : vector<1x128xf32>
    %cst_10 = arith.constant 0.000000e+00 : f32
    %18 = vector.broadcast %cst_10 : f32 to vector<1x128xf32>
    %19 = arith.maximumf %17, %18 : vector<1x128xf32>
    %cst_11 = arith.constant 9.99999974E-6 : f32
    %20 = vector.broadcast %cst_11 : f32 to vector<1x128xf32>
    %21 = arith.addf %19, %20 : vector<1x128xf32>
    %22 = math.rsqrt %21 : vector<1x128xf32>
    %23 = arith.mulf %4, %22 : vector<1x128xf32>
    %24 = arith.mulf %10, %23 : vector<1x128xf32>
    %25 = arith.subf %5, %24 : vector<1x128xf32>
    %26 = vector.broadcast %23 : vector<1x128xf32> to vector<8x128xf32>
    %27 = arith.mulf %6, %26 : vector<8x128xf32>
    %28 = vector.broadcast %25 : vector<1x128xf32> to vector<8x128xf32>
    %29 = arith.addf %27, %28 : vector<8x128xf32>
    %cst_12 = arith.constant 0.000000e+00 : f32
    %30 = vector.broadcast %cst_12 : f32 to vector<8x128xf32>
    %31 = arith.maximumf %29, %30 : vector<8x128xf32>
    %c1 = arith.constant 1 : index
    %c0_13 = arith.constant 0 : index
    %c0_14 = arith.constant 0 : index
    %32 = vector.load %arg1[%c1, %c0_13, %c0_14] : memref<3x128x128xf32, #tpu.memory_space<vmem>>, vector<1x128x128xf32>
    %33 = vector.shape_cast %32 : vector<1x128x128xf32> to vector<128x128xf32>
    %34 = vector.extract_strided_slice %0 {offsets = [2, 0], sizes = [1, 128], strides = [1, 1]} : vector<5x128xf32> to vector<1x128xf32>
    %35 = vector.extract_strided_slice %0 {offsets = [3, 0], sizes = [1, 128], strides = [1, 1]} : vector<5x128xf32> to vector<1x128xf32>
    %cst_15 = arith.constant dense<0.000000e+00> : vector<8x128xf32>
    %36 = tpu.matmul %31, %33, %cst_15 {dimension_numbers = #tpu.dot_dimension_numbers<[1], [0], [0], [1], [0, 0, 1, 1], [], []>} : vector<8x128xf32>, vector<128x128xf32>, vector<8x128xf32> -> vector<8x128xf32>
    %cst_16 = arith.constant dense<0.000000e+00> : vector<128xf32>
    %37 = vector.multi_reduction <add>, %36, %cst_16 [0] : vector<8x128xf32> to vector<128xf32>
    %38 = vector.shape_cast %37 : vector<128xf32> to vector<1x128xf32>
    %cst_17 = arith.constant 8.000000e+00 : f32
    %39 = vector.broadcast %cst_17 : f32 to vector<1x128xf32>
    %40 = arith.divf %38, %39 : vector<1x128xf32>
    %41 = arith.mulf %36, %36 : vector<8x128xf32>
    %cst_18 = arith.constant dense<0.000000e+00> : vector<128xf32>
    %42 = vector.multi_reduction <add>, %41, %cst_18 [0] : vector<8x128xf32> to vector<128xf32>
    %43 = vector.shape_cast %42 : vector<128xf32> to vector<1x128xf32>
    %cst_19 = arith.constant 8.000000e+00 : f32
    %44 = vector.broadcast %cst_19 : f32 to vector<1x128xf32>
    %45 = arith.divf %43, %44 : vector<1x128xf32>
    %46 = arith.mulf %40, %40 : vector<1x128xf32>
    %47 = arith.subf %45, %46 : vector<1x128xf32>
    %cst_20 = arith.constant 0.000000e+00 : f32
    %48 = vector.broadcast %cst_20 : f32 to vector<1x128xf32>
    %49 = arith.maximumf %47, %48 : vector<1x128xf32>
    %cst_21 = arith.constant 9.99999974E-6 : f32
    %50 = vector.broadcast %cst_21 : f32 to vector<1x128xf32>
    %51 = arith.addf %49, %50 : vector<1x128xf32>
    %52 = math.rsqrt %51 : vector<1x128xf32>
    %53 = arith.mulf %34, %52 : vector<1x128xf32>
    %54 = arith.mulf %40, %53 : vector<1x128xf32>
    %55 = arith.subf %35, %54 : vector<1x128xf32>
    %56 = vector.broadcast %53 : vector<1x128xf32> to vector<8x128xf32>
    %57 = arith.mulf %36, %56 : vector<8x128xf32>
    %58 = vector.broadcast %55 : vector<1x128xf32> to vector<8x128xf32>
    %59 = arith.addf %57, %58 : vector<8x128xf32>
    %cst_22 = arith.constant 0.000000e+00 : f32
    %60 = vector.broadcast %cst_22 : f32 to vector<8x128xf32>
    %61 = arith.maximumf %59, %60 : vector<8x128xf32>
    %62 = vector.extract_strided_slice %0 {offsets = [4, 0], sizes = [1, 128], strides = [1, 1]} : vector<5x128xf32> to vector<1x128xf32>
    %c2 = arith.constant 2 : index
    %c0_23 = arith.constant 0 : index
    %c0_24 = arith.constant 0 : index
    %63 = vector.load %arg1[%c2, %c0_23, %c0_24] : memref<3x128x128xf32, #tpu.memory_space<vmem>>, vector<1x128x128xf32>
    %64 = vector.shape_cast %63 : vector<1x128x128xf32> to vector<128x128xf32>
    %cst_25 = arith.constant dense<0.000000e+00> : vector<8x128xf32>
    %65 = tpu.matmul %61, %64, %cst_25 {dimension_numbers = #tpu.dot_dimension_numbers<[1], [0], [0], [1], [0, 0, 1, 1], [], []>} : vector<8x128xf32>, vector<128x128xf32>, vector<8x128xf32> -> vector<8x128xf32>
    %66 = vector.broadcast %62 : vector<1x128xf32> to vector<8x128xf32>
    %67 = arith.addf %65, %66 : vector<8x128xf32>
    %c0_26 = arith.constant 0 : index
    %c0_27 = arith.constant 0 : index
    %68 = vector.load %arg3[%c0_26, %c0_27] : memref<8x128xf32, #tpu.memory_space<vmem>>, vector<8x128xf32>
    tpu.vector_store %arg3[%c0_26, %c0_27], %67 {strides = array<i32>} : memref<8x128xf32, #tpu.memory_space<vmem>>, vector<8x128xf32>,
    return
  }
}

</mosaic_0001>

<llo_original>
// kernel: tpu_custom_call.1
$region0: #{tpu_custom_call.1}
  #allocation0 [shape = 'u32[]', space=smem, size = 0x4, offset = 0x4, fixed_abs, tag = 'smem constant byte address 0x4 - core index']
  #allocation1 [shape = 'u32[72,128]{1,0:T(1,128)}', space=vmem, size = 0x9000, scoped, tag = 'internal scratch']
  %s0 = inlined_call_operand.hbm [shape: f32[8,128], index: 0, kind: input, shape index: {}]
  %s1 = inlined_call_operand.hbm [shape: f32[3,128,128], index: 1, kind: input, shape index: {}]
  %s2 = inlined_call_operand.hbm [shape: f32[5,128], index: 2, kind: input, shape index: {}]
  %s3 = inlined_call_operand.hbm [shape: f32[8,128], index: 3, kind: output, shape index: {}]
  %s4 = sld [smem:[#allocation0]]
  $region34: #{tpu_custom_call.1} parent=0
    _
  %s6 = ssub.s32 1, %s4
  %s7 = scalar_select 0, %s6, %s4
  $region1: #{tpu_custom_call.1} parent=0
    #allocation2 [shape = 'u8[4096]{0}', space=vmem, size = 0x1000, scoped, tag = 'input window, operand 0, single buffered']
    #allocation3 [shape = 's32[1]{0}', space=sflag, size = 0x4, scoped, tag = 'scoped memory for tpu_custom_call.1']
    #allocation4 [shape = 's32[1]{0}', space=sflag, size = 0x4, scoped, tag = 'scoped memory for tpu_custom_call.1']
    #allocation5 [shape = 'u8[196608]{0}', space=vmem, size = 0x30000, scoped, tag = 'input window, operand 1, single buffered']
    #allocation6 [shape = 's32[1]{0}', space=sflag, size = 0x4, scoped, tag = 'scoped memory for tpu_custom_call.1']
    #allocation7 [shape = 'u8[4096]{0}', space=vmem, size = 0x1000, scoped, tag = 'input window, operand 2, single buffered']
    #allocation8 [shape = 'u8[4096]{0}', space=vmem, size = 0x1000, scoped, tag = 'output window, operand 0, single buffered']
    %8 = vsyncpa [#allocation3], 0
    %9 = vsyncpa [#allocation6], 0
    %10 = vsyncpa [#allocation4], 0
    // Predicated region
    $region2: #{tpu_custom_call.1} parent=1 // pred_check
      _
    $region3: #{tpu_custom_call.1} parent=1 // pred_check_branch
      %12 = sbr.rel (0) target = $region5
    $region4: #{tpu_custom_call.1} parent=1 // pred_region
      %14 = vsyncadd [#allocation3], 0
      %s16 = sshll.u32 %s0, 4
      %s17 = int_to_ptr.hbm [resolvable:$true] %s16
      %s18 = sshll.u32 [#allocation2], 4
      %s19 = int_to_ptr.vmem [resolvable:$true] %s18
      %21 = dma.hbm_to_vmem [thread:$0]  %s17, 128, %s19, [#allocation3]
    $region5: #{tpu_custom_call.1} parent=1 // pred_fallthru
      _
    // Predicated region
    $region6: #{tpu_custom_call.1} parent=1 // pred_check
      _
    $region7: #{tpu_custom_call.1} parent=1 // pred_check_branch
      %23 = sbr.rel (0) target = $region9
    $region8: #{tpu_custom_call.1} parent=1 // pred_region
      %25 = vsyncadd [#allocation6], 0
      %s26 = sshll.u32 %s1, 4
      %s27 = int_to_ptr.hbm [resolvable:$true] %s26
      %s28 = sshll.u32 [#allocation5], 4
      %s29 = int_to_ptr.vmem [resolvable:$true] %s28
      %34 = dma.hbm_to_vmem [thread:$0]  %s27, 6144, %s29, [#allocation6], 128, 128, 8
    $region9: #{tpu_custom_call.1} parent=1 // pred_fallthru
      _
    // Predicated region
    $region10: #{tpu_custom_call.1} parent=1 // pred_check
      _
    $region11: #{tpu_custom_call.1} parent=1 // pred_check_branch
      %36 = sbr.rel (0) target = $region13
    $region12: #{tpu_custom_call.1} parent=1 // pred_region
      %38 = vsyncadd [#allocation6], 0
      %s40 = sshll.u32 %s2, 4
      %s41 = int_to_ptr.hbm [resolvable:$true] %s40
      %s42 = sshll.u32 [#allocation7], 4
      %s43 = int_to_ptr.vmem [resolvable:$true] %s42
      %45 = dma.hbm_to_vmem [thread:$0]  %s41, 128, %s43, [#allocation6]
    $region13: #{tpu_custom_call.1} parent=1 // pred_fallthru
      _
    // Predicated region
    $region14: #{tpu_custom_call.1} parent=1 // pred_check
      _
    $region15: #{tpu_custom_call.1} parent=1 // pred_check_branch
      %47 = sbr.rel (0) target = $region17
    $region16: #{tpu_custom_call.1} parent=1 // pred_region
      %49 = dma.done [#allocation3], 128
    $region17: #{tpu_custom_call.1} parent=1 // pred_fallthru
      _
    // Predicated region
    $region18: #{tpu_custom_call.1} parent=1 // pred_check
      _
    $region19: #{tpu_custom_call.1} parent=1 // pred_check_branch
      %51 = sbr.rel (0) target = $region21
    $region20: #{tpu_custom_call.1} parent=1 // pred_region
      %53 = dma.done [#allocation6], 6144
    $region21: #{tpu_custom_call.1} parent=1 // pred_fallthru
      _
    // Predicated region
    $region22: #{tpu_custom_call.1} parent=1 // pred_check
      _
    $region23: #{tpu_custom_call.1} parent=1 // pred_check_branch
      %55 = sbr.rel (0) target = $region25
    $region24: #{tpu_custom_call.1} parent=1 // pred_region
      %57 = dma.done [#allocation6], 128
    $region25: #{tpu_custom_call.1} parent=1 // pred_fallthru
      _
    %v58 = vld [vmem:[#allocation7] sm:$0x1f]
    %v59 = vld [vmem:[#allocation2] sm:$0xff]
    %v60 = vld [vmem:[#allocation5] sm:$0xff]
    %v61 = vld [vmem:[#allocation5 + $0x8] sm:$0xff]
    %v62 = vld [vmem:[#allocation5 + $0x10] sm:$0xff]
    %v63 = vld [vmem:[#allocation5 + $0x18] sm:$0xff]
    %v64 = vld [vmem:[#allocation5 + $0x20] sm:$0xff]
    %v65 = vld [vmem:[#allocation5 + $0x28] sm:$0xff]
    %v66 = vld [vmem:[#allocation5 + $0x30] sm:$0xff]
    %v67 = vld [vmem:[#allocation5 + $0x38] sm:$0xff]
    %v68 = vld [vmem:[#allocation5 + $0x40] sm:$0xff]
    %v69 = vld [vmem:[#allocation5 + $0x48] sm:$0xff]
    %v70 = vld [vmem:[#allocation5 + $0x50] sm:$0xff]
    %v71 = vld [vmem:[#allocation5 + $0x58] sm:$0xff]
    %v72 = vld [vmem:[#allocation5 + $0x60] sm:$0xff]
    %v73 = vld [vmem:[#allocation5 + $0x68] sm:$0xff]
    %v74 = vld [vmem:[#allocation5 + $0x70] sm:$0xff]
    %v75 = vld [vmem:[#allocation5 + $0x78] sm:$0xff]
    %76 = vmatpush.msra.mxu0 %v75
    %77 = vmatpush.msra.mxu0 %v74
    %78 = vmatpush.msra.mxu0 %v73
    %79 = vmatpush.msra.mxu0 %v72
    %80 = vmatpush.msra.mxu0 %v71
    %81 = vmatpush.msra.mxu0 %v70
    %82 = vmatpush.msra.mxu0 %v69
    %83 = vmatpush.msra.mxu0 %v68
    %84 = vmatpush.msra.mxu0 %v67
    %85 = vmatpush.msra.mxu0 %v66
    %86 = vmatpush.msra.mxu0 %v65
    %87 = vmatpush.msra.mxu0 %v64
    %88 = vmatpush.msra.mxu0 %v63
    %89 = vmatpush.msra.mxu0 %v62
    %90 = vmatpush.msra.mxu0 %v61
    %91 = vmatpush.msra.mxu0 %v60
    %92 = vmatmul.f32.gmra.mxu0 %v59
    %v93 = vpop.f32.mrf.mxu0
    %v94 = vadd.f32 0.0, %v93
    %95 = vdwg.mxu0
    %v96 = vrot.slane %v94, 4
    %v97 = vadd.f32 %v94, %v96
    %v98 = vrot.slane %v97, 2
    %v99 = vadd.f32 %v97, %v98
    %v100 = vrot.slane %v99, 1
    %v101 = vadd.f32 %v99, %v100
    %v102 = vrcp.pop 8.0
    %v103 = vmul.f32 8.0, %v102
    %v104 = vsub.f32 1.0, %v103
    %v105 = vmul.f32 %v102, %v104
    %v106 = vadd.f32 %v102, %v105
    %vm107 = vweird.f32 %v102
    %v108 = vsel %vm107, %v102, %v106
    %v109 = vmul.f32 %v101, %v108
    %v110 = vmul.f32 %v94, %v94
    %v111 = vrot.slane %v110, 4
    %v112 = vadd.f32 %v110, %v111
    %v113 = vrot.slane %v112, 2
    %v114 = vadd.f32 %v112, %v113
    %v115 = vrot.slane %v114, 1
    %v116 = vadd.f32 %v114, %v115
    %v117 = vmul.f32 %v116, %v108
    %v118 = vmul.f32 %v109, %v109
    %v119 = vsub.f32 %v117, %v118
    %v120 = vmax.f32 %v119, 0.0
    %v121 = vadd.f32 %v120, 1e-05
    %v122 = vrsqrt.pop %v121
    %v123 = vmul.f32 %v122, %v121
    %v124 = vmul.f32 %v123, %v122
    %v125 = vmul.f32 0.5, %v124
    %v126 = vsub.f32 1.5, %v125
    %v127 = vmul.f32 %v122, %v126
    %vm128 = vweird.f32 %v121
    %vm129 = vweird.f32 %v122
    %vm130 = vmor %vm128, %vm129
    %v131 = vsel %vm130, %v122, %v127
    %v132 = vmul.f32 %v58, %v131
    %v133 = vmul.f32 %v109, %v132
    %v135 = vrot.slane %v133, 7
    %v137 = vsub.f32 %v58, %v135
    %v138 = vperm.slane %v132, 0
    %v139 = vmul.f32 %v94, %v138
    %v140 = vperm.slane %v137, 1
    %v141 = vadd.f32 %v139, %v140
    %v142 = vmax.f32 %v141, 0.0
    %s143 = scalar_lea.vmem [#allocation5], 128
    %v144 = vld [vmem:[%s143] sm:$0xff]
    %v145 = vld [vmem:[%s143 + $0x8] sm:$0xff]
    %v146 = vld [vmem:[%s143 + $0x10] sm:$0xff]
    %v147 = vld [vmem:[%s143 + $0x18] sm:$0xff]
    %v148 = vld [vmem:[%s143 + $0x20] sm:$0xff]
    %v149 = vld [vmem:[%s143 + $0x28] sm:$0xff]
    %v150 = vld [vmem:[%s143 + $0x30] sm:$0xff]
    %v151 = vld [vmem:[%s143 + $0x38] sm:$0xff]
    %v152 = vld [vmem:[%s143 + $0x40] sm:$0xff]
    %v153 = vld [vmem:[%s143 + $0x48] sm:$0xff]
    %v154 = vld [vmem:[%s143 + $0x50] sm:$0xff]
    %v155 = vld [vmem:[%s143 + $0x58] sm:$0xff]
    %v156 = vld [vmem:[%s143 + $0x60] sm:$0xff]
    %v157 = vld [vmem:[%s143 + $0x68] sm:$0xff]
    %v158 = vld [vmem:[%s143 + $0x70] sm:$0xff]
    %v159 = vld [vmem:[%s143 + $0x78] sm:$0xff]
    %160 = vmatpush.msra.mxu0 %v159
    %161 = vmatpush.msra.mxu0 %v158
    %162 = vmatpush.msra.mxu0 %v157
    %163 = vmatpush.msra.mxu0 %v156
    %164 = vmatpush.msra.mxu0 %v155
    %165 = vmatpush.msra.mxu0 %v154
    %166 = vmatpush.msra.mxu0 %v153
    %167 = vmatpush.msra.mxu0 %v152
    %168 = vmatpush.msra.mxu0 %v151
    %169 = vmatpush.msra.mxu0 %v150
    %170 = vmatpush.msra.mxu0 %v149
    %171 = vmatpush.msra.mxu0 %v148
    %172 = vmatpush.msra.mxu0 %v147
    %173 = vmatpush.msra.mxu0 %v146
    %174 = vmatpush.msra.mxu0 %v145
    %175 = vmatpush.msra.mxu0 %v144
    %176 = vmatmul.f32.gmra.mxu0 %v142
    %v177 = vpop.f32.mrf.mxu0
    %v178 = vadd.f32 0.0, %v177
    %179 = vdwg.mxu0
    %v180 = vrot.slane %v178, 4
    %v181 = vadd.f32 %v178, %v180
    %v182 = vrot.slane %v181, 2
    %v183 = vadd.f32 %v181, %v182
    %v184 = vrot.slane %v183, 1
    %v185 = vadd.f32 %v183, %v184
    %v186 = vmul.f32 %v185, %v108
    %v187 = vmul.f32 %v178, %v178
    %v188 = vrot.slane %v187, 4
    %v189 = vadd.f32 %v187, %v188
    %v190 = vrot.slane %v189, 2
    %v191 = vadd.f32 %v189, %v190
    %v192 = vrot.slane %v191, 1
    %v193 = vadd.f32 %v191, %v192
    %v194 = vmul.f32 %v193, %v108
    %v195 = vmul.f32 %v186, %v186
    %v196 = vsub.f32 %v194, %v195
    %v197 = vmax.f32 %v196, 0.0
    %v198 = vadd.f32 %v197, 1e-05
    %v199 = vrsqrt.pop %v198
    %v200 = vmul.f32 %v199, %v198
    %v201 = vmul.f32 %v200, %v199
    %v202 = vmul.f32 0.5, %v201
    %v203 = vsub.f32 1.5, %v202
    %v204 = vmul.f32 %v199, %v203
    %vm205 = vweird.f32 %v198
    %vm206 = vweird.f32 %v199
    %vm207 = vmor %vm205, %vm206
    %v208 = vsel %vm207, %v199, %v204
    %v209 = vmul.f32 %v58, %v208
    %v210 = vmul.f32 %v186, %v209
    %v212 = vrot.slane %v210, 7
    %v214 = vsub.f32 %v58, %v212
    %v215 = vperm.slane %v209, 2
    %v216 = vmul.f32 %v178, %v215
    %v217 = vperm.slane %v214, 3
    %v218 = vadd.f32 %v216, %v217
    %v219 = vmax.f32 %v218, 0.0
    %s220 = scalar_lea.vmem [#allocation5], 256
    %v221 = vld [vmem:[%s220] sm:$0xff]
    %v222 = vld [vmem:[%s220 + $0x8] sm:$0xff]
    %v223 = vld [vmem:[%s220 + $0x10] sm:$0xff]
    %v224 = vld [vmem:[%s220 + $0x18] sm:$0xff]
    %v225 = vld [vmem:[%s220 + $0x20] sm:$0xff]
    %v226 = vld [vmem:[%s220 + $0x28] sm:$0xff]
    %v227 = vld [vmem:[%s220 + $0x30] sm:$0xff]
    %v228 = vld [vmem:[%s220 + $0x38] sm:$0xff]
    %v229 = vld [vmem:[%s220 + $0x40] sm:$0xff]
    %v230 = vld [vmem:[%s220 + $0x48] sm:$0xff]
    %v231 = vld [vmem:[%s220 + $0x50] sm:$0xff]
    %v232 = vld [vmem:[%s220 + $0x58] sm:$0xff]
    %v233 = vld [vmem:[%s220 + $0x60] sm:$0xff]
    %v234 = vld [vmem:[%s220 + $0x68] sm:$0xff]
    %v235 = vld [vmem:[%s220 + $0x70] sm:$0xff]
    %v236 = vld [vmem:[%s220 + $0x78] sm:$0xff]
    %v237 = vperm.slane %v58, 4
    %238 = vmatpush.msra.mxu0 %v236
    %239 = vmatpush.msra.mxu0 %v235
    %240 = vmatpush.msra.mxu0 %v234
    %241 = vmatpush.msra.mxu0 %v233
    %242 = vmatpush.msra.mxu0 %v232
    %243 = vmatpush.msra.mxu0 %v231
    %244 = vmatpush.msra.mxu0 %v230
    %245 = vmatpush.msra.mxu0 %v229
    %246 = vmatpush.msra.mxu0 %v228
    %247 = vmatpush.msra.mxu0 %v227
    %248 = vmatpush.msra.mxu0 %v226
    %249 = vmatpush.msra.mxu0 %v225
    %250 = vmatpush.msra.mxu0 %v224
    %251 = vmatpush.msra.mxu0 %v223
    %252 = vmatpush.msra.mxu0 %v222
    %253 = vmatpush.msra.mxu0 %v221
    %254 = vmatmul.f32.gmra.mxu0 %v219
    %v255 = vpop.f32.mrf.mxu0
    %v256 = vadd.f32 %v237, %v255
    %257 = vdwg.mxu0
    %258 = vst [vmem:[#allocation8] sm:$0xff] %v256
    // Predicated region
    $region26: #{tpu_custom_call.1} parent=1 // pred_check
      _
    $region27: #{tpu_custom_call.1} parent=1 // pred_check_branch
      %260 = sbr.rel (0) target = $region29
    $region28: #{tpu_custom_call.1} parent=1 // pred_region
      %262 = vsyncadd [#allocation4], 0
      %s264 = sshll.u32 [#allocation8], 4
      %s265 = int_to_ptr.vmem [resolvable:$true] %s264
      %s266 = sshll.u32 %s3, 4
      %s267 = int_to_ptr.hbm [resolvable:$true] %s266
      %269 = dma.vmem_to_hbm [thread:$0]  %s265, 128, %s267, [#allocation4]
    $region29: #{tpu_custom_call.1} parent=1 // pred_fallthru
      _
    // Predicated region
    $region30: #{tpu_custom_call.1} parent=1 // pred_check
      _
    $region31: #{tpu_custom_call.1} parent=1 // pred_check_branch
      %271 = sbr.rel (0) target = $region33
    $region32: #{tpu_custom_call.1} parent=1 // pred_region
      %273 = dma.done [#allocation4], 128
    $region33: #{tpu_custom_call.1} parent=1 // pred_fallthru
      _
    %274 = vsyncpa [#allocation3], 1
    %275 = vsyncpa [#allocation6], 1
    %276 = vsyncpa [#allocation4], 1

</llo_original>
